<compile_context>
chip_gen: v6e
topology: v6e:2x2x1
jax: 0.10.0
libtpu: 0.0.40
codegen_flags: <defaults>
</compile_context>

<pallas_src>
import math

import jax
import jax.numpy as jnp
from jax import lax
from jax.experimental import pallas as pl
from jax.experimental.pallas import tpu as pltpu

_LANES = 128


def _cdiv(a, b):
    return -(-a // b)


def _round_up(x, m):
    return ((x + m - 1) // m) * m


def _make_mse_kernel(eff_block, inner, lanes, rows_total):
    """Build the per-split sum-of-squared-diff kernel.

    Grid = (num_splits [parallel], blocks_per_split [arbitrary/reduction]).
    Closure constants: eff_block (rows per block), inner (rows per register-
    resident chunk), lanes (=128), rows_total (true number of valid rows).
    """
    n_chunks = eff_block // inner

    def _chunk_sum(x_ref, t_ref, row0, masked):
        # Fold the block into an (8, lanes) partial sum, chunk by chunk, keeping
        # the working set in registers (no big VMEM intermediates).
        def body(j, acc):
            r = pl.multiple_of(j * inner, inner)
            xs = x_ref[pl.ds(r, inner), :].astype(jnp.float32)
            ts = t_ref[pl.ds(r, inner), :].astype(jnp.float32)
            d = xs - ts
            sq = d * d
            if masked:
                rid = row0 + r + lax.broadcasted_iota(jnp.int32, (inner, lanes), 0)
                sq = jnp.where(rid < rows_total, sq, 0.0)
            return acc + jnp.sum(sq.reshape(inner // 8, 8, lanes), axis=0)

        return lax.fori_loop(0, n_chunks, body,
                             jnp.zeros((8, lanes), jnp.float32),
                             unroll=not masked)

    def kernel(x_ref, t_ref, o_ref, acc_ref):
        c = pl.program_id(0)
        i = pl.program_id(1)
        nsteps = pl.num_programs(1)

        @pl.when(i == 0)
        def _():
            acc_ref[...] = jnp.zeros_like(acc_ref)

        # Logical first row covered by this (split, step) block.
        row0 = (c * nsteps + i) * eff_block

        # Fast path: block fully in bounds (all but at most one block per split).
        @pl.when(row0 + eff_block <= rows_total)
        def _():
            acc_ref[...] += _chunk_sum(x_ref, t_ref, row0, masked=False)

        # Tail path: ragged last block, or the (clamped) fully-out-of-range block
        # of the last split. Mask rows >= rows_total; garbage in the unspecified
        # out-of-bounds region is zeroed by the select. Runs at most once per
        # split, so the extra VPU work is irrelevant.
        @pl.when(row0 + eff_block > rows_total)
        def _():
            acc_ref[...] += _chunk_sum(x_ref, t_ref, row0, masked=True)

        # Final in-kernel reduction: one scalar partial per split.
        @pl.when(i == nsteps - 1)
        def _():
            o_ref[...] = jnp.sum(acc_ref[...], keepdims=True)

    return kernel


def content_loss_forward(x, target, *, tile_bytes=2 * 1024 * 1024, num_splits=2):
    """Returns (output, loss): output == x (pass-through),
    loss == mean((x - target)**2), matching F.mse_loss default 'mean' reduction."""
    assert x.shape == target.shape, "input and target must have the same shape"
    assert x.dtype == target.dtype, "input and target must have the same dtype"
    total = x.size
    lanes = _LANES

    # Flatten in the ORIGINAL dtype (stream bf16/f32 as-is; cast inside kernel).
    xf = x.reshape(-1)
    tf = target.reshape(-1)

    rows = _cdiv(total, lanes)
    padded_total = rows * lanes
    if padded_total != total:
        # Only the <128-element lane remainder is ever padded; zeros contribute 0
        # to (x - t)^2. The row-level ragged tail is masked inside the kernel.
        xf = jnp.pad(xf, (0, padded_total - total))
        tf = jnp.pad(tf, (0, padded_total - total))
    x2 = xf.reshape(rows, lanes)
    t2 = tf.reshape(rows, lanes)

    # Tile sized in bytes (~2 MiB per input tile): 4096 rows f32 / 8192 rows bf16.
    itemsize = jnp.dtype(x.dtype).itemsize
    max_block_rows = max(16, (tile_bytes // (lanes * itemsize)) // 16 * 16)
    # Shrink for small inputs so we never stream (much) more than the real data;
    # keep a multiple of 16 (legal f32 (8,128) and bf16 (16,128) sublane packing).
    eff_block = min(max_block_rows, _round_up(max(_cdiv(rows, num_splits), 16), 16))

    nblocks = _cdiv(rows, eff_block)          # real blocks needed
    bps = _cdiv(nblocks, num_splits)          # blocks per split (grid over-covers
    grid = (num_splits, bps)                  # by at most num_splits-1 blocks)
    last_block = nblocks - 1

    def in_map(c, i):
        # Clamp so a (rare) fully out-of-range step of the last split re-reads the
        # last real block instead of indexing past the array; the kernel's row
        # mask zeroes its contribution.
        return (jnp.minimum(c * bps + i, last_block), 0)

    inner = math.gcd(eff_block, 128)          # rows per register-resident chunk
    kernel = _make_mse_kernel(eff_block, inner, lanes, rows)

    partials = pl.pallas_call(
        kernel,
        out_shape=jax.ShapeDtypeStruct((num_splits, 1, 1), jnp.float32),
        grid_spec=pltpu.PrefetchScalarGridSpec(
            num_scalar_prefetch=0,
            grid=grid,
            in_specs=[
                pl.BlockSpec((eff_block, lanes), in_map),
                pl.BlockSpec((eff_block, lanes), in_map),
            ],
            # One (1,1) scalar partial per split; leading dim squeezed in-kernel.
            out_specs=pl.BlockSpec((None, 1, 1), lambda c, i: (c, 0, 0)),
            scratch_shapes=[pltpu.VMEM((8, lanes), jnp.float32)],
        ),
        compiler_params=pltpu.CompilerParams(
            # Leading split axis parallel (2-way megacore on v7x);
            # trailing axis is the sequential reduction.
            dimension_semantics=("parallel", "arbitrary"),
        ),
    )(x2, t2)

    loss = jnp.sum(partials) / jnp.float32(total)
    # ContentLoss.forward returns the input unchanged (loss stashed as side value).
    return x, loss


if __name__ == "__main__":
    key = jax.random.PRNGKey(0)
    k1, k2, k3, k4 = jax.random.split(key, 4)

    # Primary test: NCHW, batch=2, channels=4, spatial=16x16 (total % 128 == 0).
    x = jax.random.normal(k1, (2, 4, 16, 16), dtype=jnp.float32)
    target = jax.random.normal(k2, (2, 4, 16, 16), dtype=jnp.float32)

    out, loss = content_loss_forward(x, target)
    out = jax.block_until_ready(out)
    loss = jax.block_until_ready(loss)

    ref_loss = jnp.mean((x - target) ** 2)
    assert jnp.allclose(loss, ref_loss, rtol=1e-5, atol=1e-6), (loss, ref_loss)
    assert jnp.array_equal(out, x)

    # Ragged test: exercises lane-remainder padding + in-kernel row masking.
    xr = jax.random.normal(k3, (2, 3, 17, 16), dtype=jnp.float32)
    tr = jax.random.normal(k4, (2, 3, 17, 16), dtype=jnp.float32)
    out_r, loss_r = content_loss_forward(xr, tr)
    loss_r = jax.block_until_ready(loss_r)
    ref_r = jnp.mean((xr - tr) ** 2)
    assert jnp.allclose(loss_r, ref_r, rtol=1e-5, atol=1e-6), (loss_r, ref_r)
    assert jnp.array_equal(out_r, xr)

    print("KERNEL_OK")
</pallas_src>

<mosaic_0001>
module attributes {stable_mosaic.version = 11 : i64} {
  func.func @kernel(%arg0: i32, %arg1: i32, %arg2: memref<16x128xf32, #tpu.memory_space<vmem>>, %arg3: memref<16x128xf32, #tpu.memory_space<vmem>>, %arg4: memref<1x1x1xf32, #tpu.memory_space<vmem>>, %arg5: memref<8x128xf32, #tpu.memory_space<vmem>>) attributes {dimension_semantics = [#tpu.dimension_semantics<parallel>, #tpu.dimension_semantics<arbitrary>], iteration_bounds = array<i64: 2, 1>, scalar_prefetch = 0 : i64, scratch_operands = 1 : i64, tpu.core_type = #tpu.core_type<tc>, window_params = [{transform_indices = @transform_0, window_bounds = array<i64: 16, 128>}, {transform_indices = @transform_1, window_bounds = array<i64: 16, 128>}, {transform_indices = @transform_2, window_bounds = array<i64: 1, 1, 1>}]} {
    %c0_i32 = arith.constant 0 : i32
    %0 = arith.cmpi eq, %arg1, %c0_i32 : i32
    %1 = arith.extui %0 : i1 to i32
    %c0_i32_0 = arith.constant 0 : i32
    %2 = arith.cmpi ne, %1, %c0_i32_0 : i32
    scf.if %2 {
      %cst = arith.constant 0.000000e+00 : f32
      %17 = vector.broadcast %cst : f32 to vector<8x128xf32>
      %c0 = arith.constant 0 : index
      %c0_9 = arith.constant 0 : index
      %18 = vector.load %arg5[%c0, %c0_9] : memref<8x128xf32, #tpu.memory_space<vmem>>, vector<8x128xf32>
      tpu.vector_store %arg5[%c0, %c0_9], %17 {strides = array<i32>} : memref<8x128xf32, #tpu.memory_space<vmem>>, vector<8x128xf32>,
    } else {
    }
    %c1_i32 = arith.constant 1 : i32
    %3 = arith.muli %arg0, %c1_i32 : i32
    %4 = arith.addi %3, %arg1 : i32
    %c16_i32 = arith.constant 16 : i32
    %5 = arith.muli %4, %c16_i32 : i32
    %c16_i32_1 = arith.constant 16 : i32
    %6 = arith.addi %5, %c16_i32_1 : i32
    %c16_i32_2 = arith.constant 16 : i32
    %7 = arith.cmpi sle, %6, %c16_i32_2 : i32
    %8 = arith.extui %7 : i1 to i32
    %c0_i32_3 = arith.constant 0 : i32
    %9 = arith.cmpi ne, %8, %c0_i32_3 : i32
    scf.if %9 {
      %c0 = arith.constant 0 : index
      %c0_9 = arith.constant 0 : index
      %17 = vector.load %arg5[%c0, %c0_9] : memref<8x128xf32, #tpu.memory_space<vmem>>, vector<8x128xf32>
      %cst = arith.constant 0.000000e+00 : f32
      %18 = vector.broadcast %cst : f32 to vector<8x128xf32>
      %c0_i32_10 = arith.constant 0 : i32
      %c16_i32_11 = arith.constant 16 : i32
      %19 = arith.muli %c0_i32_10, %c16_i32_11 : i32
      %20 = tpu.assume_multiple %19, 16 : i32
      %21 = arith.index_cast %20 : i32 to index
      %c0_12 = arith.constant 0 : index
      %22 = vector.load %arg2[%21, %c0_12] : memref<16x128xf32, #tpu.memory_space<vmem>>, vector<16x128xf32>
      %23 = arith.index_cast %20 : i32 to index
      %c0_13 = arith.constant 0 : index
      %24 = vector.load %arg3[%23, %c0_13] : memref<16x128xf32, #tpu.memory_space<vmem>>, vector<16x128xf32>
      %25 = arith.subf %22, %24 : vector<16x128xf32>
      %26 = arith.mulf %25, %25 : vector<16x128xf32>
      %27 = vector.shape_cast %26 : vector<16x128xf32> to vector<2x8x128xf32>
      %cst_14 = arith.constant dense<0.000000e+00> : vector<8x128xf32>
      %28 = vector.multi_reduction <add>, %27, %cst_14 [0] : vector<2x8x128xf32> to vector<8x128xf32>
      %29 = arith.addf %18, %28 : vector<8x128xf32>
      %c1_i32_15 = arith.constant 1 : i32
      %30 = arith.addf %17, %29 : vector<8x128xf32>
      %c0_16 = arith.constant 0 : index
      %c0_17 = arith.constant 0 : index
      %31 = vector.load %arg5[%c0_16, %c0_17] : memref<8x128xf32, #tpu.memory_space<vmem>>, vector<8x128xf32>
      tpu.vector_store %arg5[%c0_16, %c0_17], %30 {strides = array<i32>} : memref<8x128xf32, #tpu.memory_space<vmem>>, vector<8x128xf32>,
    } else {
    }
    %c16_i32_4 = arith.constant 16 : i32
    %10 = arith.addi %5, %c16_i32_4 : i32
    %c16_i32_5 = arith.constant 16 : i32
    %11 = arith.cmpi sgt, %10, %c16_i32_5 : i32
    %12 = arith.extui %11 : i1 to i32
    %c0_i32_6 = arith.constant 0 : i32
    %13 = arith.cmpi ne, %12, %c0_i32_6 : i32
    scf.if %13 {
      %c0 = arith.constant 0 : index
      %c0_9 = arith.constant 0 : index
      %17 = vector.load %arg5[%c0, %c0_9] : memref<8x128xf32, #tpu.memory_space<vmem>>, vector<8x128xf32>
      %cst = arith.constant 0.000000e+00 : f32
      %18 = vector.broadcast %cst : f32 to vector<8x128xf32>
      %c0_i32_10 = arith.constant 0 : i32
      %c16_i32_11 = arith.constant 16 : i32
      %19 = arith.muli %c0_i32_10, %c16_i32_11 : i32
      %20 = tpu.assume_multiple %19, 16 : i32
      %21 = arith.index_cast %20 : i32 to index
      %c0_12 = arith.constant 0 : index
      %22 = vector.load %arg2[%21, %c0_12] : memref<16x128xf32, #tpu.memory_space<vmem>>, vector<16x128xf32>
      %23 = arith.index_cast %20 : i32 to index
      %c0_13 = arith.constant 0 : index
      %24 = vector.load %arg3[%23, %c0_13] : memref<16x128xf32, #tpu.memory_space<vmem>>, vector<16x128xf32>
      %25 = arith.subf %22, %24 : vector<16x128xf32>
      %26 = arith.mulf %25, %25 : vector<16x128xf32>
      %27 = arith.addi %5, %20 : i32
      %28 = tpu.iota {dimensions = array<i32: 0>} : vector<16x128xi32>
      %29 = vector.broadcast %27 : i32 to vector<16x128xi32>
      %30 = arith.addi %29, %28 : vector<16x128xi32>
      %c16_i32_14 = arith.constant 16 : i32
      %31 = vector.broadcast %c16_i32_14 : i32 to vector<16x128xi32>
      %32 = arith.cmpi slt, %30, %31 : vector<16x128xi32>
      %cst_15 = arith.constant 0.000000e+00 : f32
      %33 = vector.broadcast %cst_15 : f32 to vector<16x128xf32>
      %34 = arith.select %32, %26, %33 : vector<16x128xi1>, vector<16x128xf32>
      %35 = vector.shape_cast %34 : vector<16x128xf32> to vector<2x8x128xf32>
      %cst_16 = arith.constant dense<0.000000e+00> : vector<8x128xf32>
      %36 = vector.multi_reduction <add>, %35, %cst_16 [0] : vector<2x8x128xf32> to vector<8x128xf32>
      %37 = arith.addf %18, %36 : vector<8x128xf32>
      %c1_i32_17 = arith.constant 1 : i32
      %38 = arith.addf %17, %37 : vector<8x128xf32>
      %c0_18 = arith.constant 0 : index
      %c0_19 = arith.constant 0 : index
      %39 = vector.load %arg5[%c0_18, %c0_19] : memref<8x128xf32, #tpu.memory_space<vmem>>, vector<8x128xf32>
      tpu.vector_store %arg5[%c0_18, %c0_19], %38 {strides = array<i32>} : memref<8x128xf32, #tpu.memory_space<vmem>>, vector<8x128xf32>,
    } else {
    }
    %c0_i32_7 = arith.constant 0 : i32
    %14 = arith.cmpi eq, %arg1, %c0_i32_7 : i32
    %15 = arith.extui %14 : i1 to i32
    %c0_i32_8 = arith.constant 0 : i32
    %16 = arith.cmpi ne, %15, %c0_i32_8 : i32
    scf.if %16 {
      %c0 = arith.constant 0 : index
      %c0_9 = arith.constant 0 : index
      %17 = vector.load %arg5[%c0, %c0_9] : memref<8x128xf32, #tpu.memory_space<vmem>>, vector<8x128xf32>
      %18 = vector.shape_cast %17 : vector<8x128xf32> to vector<1x8x128xf32>
      %cst = arith.constant dense<0.000000e+00> : vector<1xf32>
      %19 = vector.multi_reduction <add>, %18, %cst [1, 2] : vector<1x8x128xf32> to vector<1xf32>
      %20 = vector.shape_cast %19 : vector<1xf32> to vector<1x1x1xf32>
      %21 = vector.extract %20[0, 0, 0] : f32 from vector<1x1x1xf32>
      %22 = vector.broadcast %21 : f32 to vector<1x1xf32>
      %c0_10 = arith.constant 0 : index
      %c0_11 = arith.constant 0 : index
      %c0_12 = arith.constant 0 : index
      %23 = vector.load %arg4[%c0_10, %c0_11, %c0_12] : memref<1x1x1xf32, #tpu.memory_space<vmem>>, vector<1x1x1xf32>
      %24 = vector.shape_cast %23 : vector<1x1x1xf32> to vector<1x1xf32>
      %25 = vector.shape_cast %22 : vector<1x1xf32> to vector<1x1x1xf32>
      tpu.vector_store %arg4[%c0_10, %c0_11, %c0_12], %25 {strides = array<i32>} : memref<1x1x1xf32, #tpu.memory_space<vmem>>, vector<1x1x1xf32>,
    } else {
    }
    return
  }
  func.func @transform_0(%arg0: i32, %arg1: i32) -> (i32, i32) {
    %c1_i32 = arith.constant 1 : i32
    %0 = arith.muli %arg0, %c1_i32 : i32
    %1 = arith.addi %0, %arg1 : i32
    %c0_i32 = arith.constant 0 : i32
    %2 = arith.minsi %1, %c0_i32 : i32
    %c0_i32_0 = arith.constant 0 : i32
    %c0_i32_1 = arith.constant 0 : i32
    return %2, %c0_i32_0 : i32, i32
  }
  func.func @transform_1(%arg0: i32, %arg1: i32) -> (i32, i32) {
    %c1_i32 = arith.constant 1 : i32
    %0 = arith.muli %arg0, %c1_i32 : i32
    %1 = arith.addi %0, %arg1 : i32
    %c0_i32 = arith.constant 0 : i32
    %2 = arith.minsi %1, %c0_i32 : i32
    %c0_i32_0 = arith.constant 0 : i32
    %c0_i32_1 = arith.constant 0 : i32
    return %2, %c0_i32_0 : i32, i32
  }
  func.func @transform_2(%arg0: i32, %arg1: i32) -> (i32, i32, i32) {
    %c0_i32 = arith.constant 0 : i32
    %c0_i32_0 = arith.constant 0 : i32
    %c0_i32_1 = arith.constant 0 : i32
    return %arg0, %c0_i32, %c0_i32_0 : i32, i32, i32
  }
}

</mosaic_0001>

<llo_original>
// kernel: tpu_custom_call.1
$region0: #{tpu_custom_call.1}
  #allocation0 [shape = 'u32[]', space=smem, size = 0x4, offset = 0x4, fixed_abs, tag = 'smem constant byte address 0x4 - core index']
  #allocation1 [shape = 'u32[144,128]{1,0:T(1,128)}', space=vmem, size = 0x12000, scoped, tag = 'internal scratch']
  #allocation2 [shape = 'f32[8,128]{1,0:T(8,128)}', space=vmem, size = 0x1000, scoped, tag = 'scratch operand']
  %s0 = inlined_call_operand.hbm [shape: f32[16,128], index: 0, kind: input, shape index: {}]
  %s1 = inlined_call_operand.hbm [shape: f32[16,128], index: 1, kind: input, shape index: {}]
  %s2 = inlined_call_operand.vmem [shape: f32[2,1,1], index: 2, kind: output, shape index: {}]
  %s3 = sld [smem:[#allocation0]]
  $region65: #{tpu_custom_call.1} parent=0
    _
  %s5 = ssub.s32 1, %s3
  %s6 = scalar_select 0, %s5, %s3
  $region1: #{tpu_custom_call.1} parent=0
    #allocation3 [shape = 'u8[16384]{0}', space=vmem, size = 0x4000, scoped, tag = 'input window, operand 0']
    #allocation4 [shape = 's32[2]{0}', space=sflag, size = 0x8, scoped, tag = 'scoped memory for tpu_custom_call.1']
    #allocation5 [shape = 'u8[16384]{0}', space=vmem, size = 0x4000, scoped, tag = 'input window, operand 1']
    #allocation6 [shape = 's32[2]{0}', space=sflag, size = 0x8, scoped, tag = 'scoped memory for tpu_custom_call.1']
    %7 = vsyncpa [#allocation4], 0
    %s8 = scalar_lea.sflag [#allocation4], 1
    %9 = vsyncpa %s8, 0
    %10 = vsyncpa [#allocation6], 0
    %s11 = scalar_lea.sflag [#allocation6], 1
    %12 = vsyncpa %s11, 0
    loop: start=0, step=1, limit=4
    $region2: #{tpu_custom_call.1} parent=1 // loop_pre_header
      _
    $region3: #{tpu_custom_call.1} parent=1 // loop_header
      %s14 = sphi 0, %s18
      %p15 = scmp.ge.s32.totalorder %s14, 4
      %s21 = sphi 0, %s33
      %s22 = sphi 0, %s29
      %s23 = sphi 0, %s21
      %s24 = sphi 0, %s22
      %s25 = sphi 0, %s23
      %s26 = sphi 0, %s24
      %s42 = sphi 0, %s44
      %s45 = sphi 0, %s42
      %s46 = sphi 0, %s45
      %s62 = sphi 0, %s46
      %s74 = sphi 0, %s76
      %s77 = sphi 0, %s74
      %s78 = sphi 0, %s77
      %s94 = sphi 0, %s78
      %s100 = sphi 0, %s102
      %s103 = sphi 0, %s100
      %s104 = sphi 0, %s103
      %s120 = sphi 0, %s104
    $region4: #{tpu_custom_call.1} parent=1 // loop_header_branch
      %17 = sbr.rel (%p15) target = $region8
    $region5: #{tpu_custom_call.1} parent=1 // loop_body
      %s19 = ssub.s32 %s14, 1
      %s20 = ssub.s32 %s14, 2
      %s27 = sadd.s32 1, %s22
      %p28 = scmp.ge.s32.totalorder %s27, 1
      %s29 = scalar_select %p28, 0, %s27
      %s30 = sadd.s32 1, %s21
      %s31 = scalar_select %p28, %s30, %s21
      %p32 = scmp.ge.s32.totalorder %s31, 2
      %s33 = scalar_select %p32, 0, %s31
      %s34 = sadd.s32 %s21, %s22
      %p35 = scmp.lt.s32.totalorder %s34, 0
      %s36 = scalar_select %p35, %s34, 0
      %s37 = sadd.s32 %s33, %s29
      %p38 = scmp.lt.s32.totalorder %s37, 0
      %s39 = scalar_select %p38, %s37, 0
      %s40 = ssub.s32 %s36, %s39
      %p41 = scmp.eq.s32.totalorder %s40, 0
      %s43 = sadd.s32 %s42, 1
      %s44 = scalar_select %p41, %s42, %s43
      %p47 = pneg %p41
      %p48 = scmp.eq.s32.totalorder %s14, 1
      %p49 = por %p47, %p48
      %p50 = scmp.ne.s32.totalorder %s42, %s45
      %p51 = scmp.eq.s32.totalorder %s14, 0
      %p52 = por %p50, %p51
      %p53 = scmp.ne.s32.totalorder %s42, %s45
      %p54 = scmp.eq.s32.totalorder %s19, 1
      %p55 = por %p53, %p54
      %p56 = scmp.ne.s32.totalorder %s45, %s46
      %p57 = scmp.eq.s32.totalorder %s19, 0
      %p58 = por %p56, %p57
      %p59 = scmp.ne.s32.totalorder %s45, %s46
      %p60 = scmp.eq.s32.totalorder %s20, 1
      %p61 = por %p59, %p60
      %p63 = scmp.ne.s32.totalorder %s46, %s62
      %p64 = scmp.eq.s32.totalorder %s20, 0
      %p65 = por %p63, %p64
      %s66 = sadd.s32 %s21, %s22
      %p67 = scmp.lt.s32.totalorder %s66, 0
      %s68 = scalar_select %p67, %s66, 0
      %s69 = sadd.s32 %s33, %s29
      %p70 = scmp.lt.s32.totalorder %s69, 0
      %s71 = scalar_select %p70, %s69, 0
      %s72 = ssub.s32 %s68, %s71
      %p73 = scmp.eq.s32.totalorder %s72, 0
      %s75 = sadd.s32 %s74, 1
      %s76 = scalar_select %p73, %s74, %s75
      %p79 = pneg %p73
      %p80 = scmp.eq.s32.totalorder %s14, 1
      %p81 = por %p79, %p80
      %p82 = scmp.ne.s32.totalorder %s74, %s77
      %p83 = scmp.eq.s32.totalorder %s14, 0
      %p84 = por %p82, %p83
      %p85 = scmp.ne.s32.totalorder %s74, %s77
      %p86 = scmp.eq.s32.totalorder %s19, 1
      %p87 = por %p85, %p86
      %p88 = scmp.ne.s32.totalorder %s77, %s78
      %p89 = scmp.eq.s32.totalorder %s19, 0
      %p90 = por %p88, %p89
      %p91 = scmp.ne.s32.totalorder %s77, %s78
      %p92 = scmp.eq.s32.totalorder %s20, 1
      %p93 = por %p91, %p92
      %p95 = scmp.ne.s32.totalorder %s78, %s94
      %p96 = scmp.eq.s32.totalorder %s20, 0
      %p97 = por %p95, %p96
      %s98 = ssub.s32 %s21, %s33
      %p99 = scmp.eq.s32.totalorder %s98, 0
      %s101 = sadd.s32 %s100, 1
      %s102 = scalar_select %p99, %s100, %s101
      %p105 = pneg %p99
      %p106 = scmp.eq.s32.totalorder %s14, 1
      %p107 = por %p105, %p106
      %p108 = scmp.ne.s32.totalorder %s100, %s103
      %p109 = scmp.eq.s32.totalorder %s14, 0
      %p110 = por %p108, %p109
      %p111 = scmp.ne.s32.totalorder %s100, %s103
      %p112 = scmp.eq.s32.totalorder %s19, 1
      %p113 = por %p111, %p112
      %p114 = scmp.ne.s32.totalorder %s103, %s104
      %p115 = scmp.eq.s32.totalorder %s19, 0
      %p116 = por %p114, %p115
      %p117 = scmp.ne.s32.totalorder %s103, %s104
      %p118 = scmp.eq.s32.totalorder %s20, 1
      %p119 = por %p117, %p118
      %p121 = scmp.ne.s32.totalorder %s104, %s120
      %p122 = scmp.eq.s32.totalorder %s20, 0
      %p123 = por %p121, %p122
      %p124 = scmp.le.s32.totalorder 1, %s14
      %p125 = scmp.lt.s32.totalorder %s14, 3
      %p126 = pnand %p124, %p125
      %p127 = pneg %p126
      // Predicated region
      $region9: #{tpu_custom_call.1} parent=5 // pred_check
        _
      $region10: #{tpu_custom_call.1} parent=5 // pred_check_branch
        %129 = sbr.rel (%p126) target = $region12
      $region11: #{tpu_custom_call.1} parent=5 // pred_region
        %s130 = ssub.s32 %s14, 1
      $region12: #{tpu_custom_call.1} parent=5 // pred_fallthru
        _
      %p131 = scmp.lt.s32.totalorder %s14, 2
      // Predicated region
      $region13: #{tpu_custom_call.1} parent=5 // pred_check
        %p132 = pneg %p131
      $region14: #{tpu_custom_call.1} parent=5 // pred_check_branch
        %134 = sbr.rel (%p132) target = $region16
      $region15: #{tpu_custom_call.1} parent=5 // pred_region
        // Predicated region
        $region17: #{tpu_custom_call.1} parent=15 // pred_check
          %p135 = pneg %p52
        $region18: #{tpu_custom_call.1} parent=15 // pred_check_branch
          %137 = sbr.rel (%p135) target = $region20
        $region19: #{tpu_custom_call.1} parent=15 // pred_region
          %s138 = sand.u32 %s42, 1
          %s139 = scalar_lea.sflag [#allocation4], %s138
          %s140 = sand.u32 %s42, 1
          %s141 = smul.addr %s140, 16
          %s142 = scalar_lea.vmem [#allocation3], %s141
          %s143 = sadd.s32 %s21, %s22
          %p144 = scmp.lt.s32.totalorder %s143, 0
          %s145 = scalar_select %p144, %s143, 0
          %s146 = smul.u32 2, %s145
          %s148 = ssub.s32 256, 256
          %149 = vsyncadd %s139, %s148
          %s150 = smul.addr %s146, 128
          %s151 = scalar_lea.hbm %s0, %s150
          %s152 = sshll.u32 %s142, 4
          %s153 = int_to_ptr.vmem [resolvable:$true] %s152
          %158 = dma.hbm_to_vmem [thread:$0]  %s151, 256, %s153, %s139, 128, 128, 8
        $region20: #{tpu_custom_call.1} parent=15 // pred_fallthru
          _
        // Predicated region
        $region21: #{tpu_custom_call.1} parent=15 // pred_check
          %p159 = pneg %p84
        $region22: #{tpu_custom_call.1} parent=15 // pred_check_branch
          %161 = sbr.rel (%p159) target = $region24
        $region23: #{tpu_custom_call.1} parent=15 // pred_region
          %s162 = sand.u32 %s74, 1
          %s163 = scalar_lea.sflag [#allocation6], %s162
          %s164 = sand.u32 %s74, 1
          %s165 = smul.addr %s164, 16
          %s166 = scalar_lea.vmem [#allocation5], %s165
          %s167 = sadd.s32 %s21, %s22
          %p168 = scmp.lt.s32.totalorder %s167, 0
          %s169 = scalar_select %p168, %s167, 0
          %s170 = smul.u32 2, %s169
          %s172 = ssub.s32 256, 256
          %173 = vsyncadd %s163, %s172
          %s174 = smul.addr %s170, 128
          %s175 = scalar_lea.hbm %s1, %s174
          %s176 = sshll.u32 %s166, 4
          %s177 = int_to_ptr.vmem [resolvable:$true] %s176
          %182 = dma.hbm_to_vmem [thread:$0]  %s175, 256, %s177, %s163, 128, 128, 8
        $region24: #{tpu_custom_call.1} parent=15 // pred_fallthru
          _
      $region16: #{tpu_custom_call.1} parent=5 // pred_fallthru
        _
      %p183 = scmp.le.s32.totalorder 1, %s14
      %p184 = scmp.lt.s32.totalorder %s14, 3
      %p185 = pnand %p183, %p184
      %p186 = pneg %p185
      // Predicated region
      $region25: #{tpu_custom_call.1} parent=5 // pred_check
        _
      $region26: #{tpu_custom_call.1} parent=5 // pred_check_branch
        %188 = sbr.rel (%p185) target = $region28
      $region27: #{tpu_custom_call.1} parent=5 // pred_region
        %s189 = ssub.s32 %s14, 1
        %s190 = sand.u32 %s45, 1
        %s191 = scalar_lea.sflag [#allocation4], %s190
        %s192 = sand.u32 %s45, 1
        %s193 = smul.addr %s192, 16
        %s194 = scalar_lea.vmem [#allocation3], %s193
        // Predicated region
        $region29: #{tpu_custom_call.1} parent=27 // pred_check
          %p195 = pneg %p58
        $region30: #{tpu_custom_call.1} parent=27 // pred_check_branch
          %197 = sbr.rel (%p195) target = $region32
        $region31: #{tpu_custom_call.1} parent=27 // pred_region
          %198 = dma.done %s191, 256
        $region32: #{tpu_custom_call.1} parent=27 // pred_fallthru
          _
        %s199 = sand.u32 %s77, 1
        %s200 = scalar_lea.sflag [#allocation6], %s199
        %s201 = sand.u32 %s77, 1
        %s202 = smul.addr %s201, 16
        %s203 = scalar_lea.vmem [#allocation5], %s202
        // Predicated region
        $region33: #{tpu_custom_call.1} parent=27 // pred_check
          %p204 = pneg %p90
        $region34: #{tpu_custom_call.1} parent=27 // pred_check_branch
          %206 = sbr.rel (%p204) target = $region36
        $region35: #{tpu_custom_call.1} parent=27 // pred_region
          %207 = dma.done %s200, 256
        $region36: #{tpu_custom_call.1} parent=27 // pred_fallthru
          _
        %s208 = sand.u32 %s45, 1
        %s209 = scalar_lea.sflag [#allocation4], %s208
        %s210 = sand.u32 %s45, 1
        %s211 = smul.addr %s210, 16
        %s212 = scalar_lea.vmem [#allocation3], %s211
        %p213 = pneg %p58
        %p214 = pneg %p55
        %s215 = sand.u32 %s77, 1
        %s216 = scalar_lea.sflag [#allocation6], %s215
        %s217 = sand.u32 %s77, 1
        %s218 = smul.addr %s217, 16
        %s219 = scalar_lea.vmem [#allocation5], %s218
        %p220 = pneg %p90
        %p221 = pneg %p87
        %p222 = pneg %p116
        %p223 = pneg %p113
        %p224 = scmp.lt.s32.totalorder %s23, 1
        %s225 = scalar_select %p224, %s23, 1
        %s226 = scalar_lea.vmem %s2, %s225
        %s227 = sadd.s32 %s23, %s24
        %p228 = scmp.lt.s32.totalorder %s227, 0
        %s229 = scalar_select %p228, %s227, 0
        %s230 = smul.u32 2, %s229
        %s231 = sadd.s32 %s23, %s24
        %p232 = scmp.lt.s32.totalorder %s231, 0
        %s233 = scalar_select %p232, %s231, 0
        %s234 = smul.u32 2, %s233
        %p235 = scmp.lt.s32.totalorder %s23, 1
        %s236 = scalar_select %p235, %s23, 1
        %s237 = scalar_lea.vmem %s2, %s236
        %p238 = scmp.eq.s32.totalorder %s24, 0
        // Predicated region
        $region37: #{tpu_custom_call.1} parent=27 // pred_check
          %p239 = pneg %p238
        $region38: #{tpu_custom_call.1} parent=27 // pred_check_branch
          %241 = sbr.rel (%p239) target = $region40
        $region39: #{tpu_custom_call.1} parent=27 // pred_region
          %242 = vst [vmem:[#allocation2] sm:$0xff] 0.0
        $region40: #{tpu_custom_call.1} parent=27 // pred_fallthru
          _
        %s243 = sadd.s32 %s23, %s24
        %s244 = smul.u32 %s243, 16
        %s245 = sadd.s32 %s244, 16
        %p246 = scmp.le.s32.totalorder %s245, 16
        // Predicated region
        $region41: #{tpu_custom_call.1} parent=27 // pred_check
          %p247 = pneg %p246
        $region42: #{tpu_custom_call.1} parent=27 // pred_check_branch
          %249 = sbr.rel (%p247) target = $region44
        $region43: #{tpu_custom_call.1} parent=27 // pred_region
          %v250 = vld [vmem:[#allocation2] sm:$0xff]
          %v251 = vld [vmem:[%s194] sm:$0xff]
          %v252 = vld [vmem:[%s194 + $0x8] sm:$0xff]
          %v253 = vld [vmem:[%s203] sm:$0xff]
          %v254 = vld [vmem:[%s203 + $0x8] sm:$0xff]
          %v255 = vsub.f32 %v251, %v253
          %v256 = vsub.f32 %v252, %v254
          %v257 = vmul.f32 %v255, %v255
          %v258 = vmul.f32 %v256, %v256
          %v259 = vadd.f32 %v257, %v258
          %v260 = vadd.f32 %v259, 0.0
          %v261 = vadd.f32 %v250, %v260
          %262 = vst [vmem:[#allocation2] sm:$0xff] %v261
        $region44: #{tpu_custom_call.1} parent=27 // pred_fallthru
          _
        %p263 = scmp.gt.s32.totalorder %s245, 16
        // Predicated region
        $region45: #{tpu_custom_call.1} parent=27 // pred_check
          %p264 = pneg %p263
        $region46: #{tpu_custom_call.1} parent=27 // pred_check_branch
          %266 = sbr.rel (%p264) target = $region48
        $region47: #{tpu_custom_call.1} parent=27 // pred_region
          %v267 = vld [vmem:[#allocation2] sm:$0xff]
          %v268 = vld [vmem:[%s194] sm:$0xff]
          %v269 = vld [vmem:[%s194 + $0x8] sm:$0xff]
          %v270 = vld [vmem:[%s203] sm:$0xff]
          %v271 = vld [vmem:[%s203 + $0x8] sm:$0xff]
          %v272 = vsub.f32 %v268, %v270
          %v273 = vsub.f32 %v269, %v271
          %v274 = vmul.f32 %v272, %v272
          %v275 = vmul.f32 %v273, %v273
          %s276 = sadd.s32 %s244, 0
          %v277 = vlaneseq
          %v278 = vshrl.u32 %v277, 7
          %v279 = vadd.s32 %v278, 8
          %v280 = vstv %s276
          %v281 = vadd.s32 %v280, %v278
          %v282 = vadd.s32 %v280, %v279
          %vm283 = vcmp.lt.s32.totalorder %v281, 16
          %vm284 = vcmp.lt.s32.totalorder %v282, 16
          %v285 = vsel %vm283, %v274, 0.0
          %v286 = vsel %vm284, %v275, 0.0
          %v287 = vadd.f32 %v285, %v286
          %v288 = vadd.f32 %v287, 0.0
          %v289 = vadd.f32 %v267, %v288
          %290 = vst [vmem:[#allocation2] sm:$0xff] %v289
        $region48: #{tpu_custom_call.1} parent=27 // pred_fallthru
          _
        // Predicated region
        $region49: #{tpu_custom_call.1} parent=27 // pred_check
          %p291 = pneg %p238
        $region50: #{tpu_custom_call.1} parent=27 // pred_check_branch
          %293 = sbr.rel (%p291) target = $region52
        $region51: #{tpu_custom_call.1} parent=27 // pred_region
          %v294 = vld [vmem:[#allocation2] sm:$0xff]
          %295 = vadd.xlane.f32.xlu0 %v294
          %v296 = vpop.xlane.xlu0 %295
          %v297 = vrot.slane %v296, 4
          %v298 = vadd.f32 %v296, %v297
          %v299 = vrot.slane %v298, 2
          %v300 = vadd.f32 %v298, %v299
          %v301 = vrot.slane %v300, 1
          %v302 = vadd.f32 %v300, %v301
          %s303 = vtos %v302
          %v304 = vstv %s303
          %vm305 = vcmask 0
          %306 = vst.msk [vmem:[%s237] sm:$0x1] %vm305, %v304
        $region52: #{tpu_custom_call.1} parent=27 // pred_fallthru
          _
        %p307 = scmp.lt.s32.totalorder %s23, 1
        %s308 = scalar_select %p307, %s23, 1
        %s309 = scalar_lea.vmem %s2, %s308
        // Predicated region
        $region53: #{tpu_custom_call.1} parent=27 // pred_check
          %p310 = pneg %p113
        $region54: #{tpu_custom_call.1} parent=27 // pred_check_branch
          %312 = sbr.rel (%p310) target = $region56
        $region55: #{tpu_custom_call.1} parent=27 // pred_region
          _
        $region56: #{tpu_custom_call.1} parent=27 // pred_fallthru
          _
      $region28: #{tpu_custom_call.1} parent=5 // pred_fallthru
        _
      %p313 = scmp.le.s32.totalorder 2, %s14
      // Predicated region
      $region57: #{tpu_custom_call.1} parent=5 // pred_check
        %p314 = pneg %p313
      $region58: #{tpu_custom_call.1} parent=5 // pred_check_branch
        %316 = sbr.rel (%p314) target = $region60
      $region59: #{tpu_custom_call.1} parent=5 // pred_region
        %s317 = ssub.s32 %s14, 2
        // Predicated region
        $region61: #{tpu_custom_call.1} parent=59 // pred_check
          %p318 = pneg %p119
        $region62: #{tpu_custom_call.1} parent=59 // pred_check_branch
          %320 = sbr.rel (%p318) target = $region64
        $region63: #{tpu_custom_call.1} parent=59 // pred_region
          %p321 = scmp.lt.s32.totalorder %s25, 1
          %s322 = scalar_select %p321, %s25, 1
          %s323 = scalar_lea.vmem %s2, %s322
        $region64: #{tpu_custom_call.1} parent=59 // pred_fallthru
          _
      $region60: #{tpu_custom_call.1} parent=5 // pred_fallthru
        _
    $region6: #{tpu_custom_call.1} parent=1 // loop_footer
      %s18 = sadd.s32 1, %s14
    $region7: #{tpu_custom_call.1} parent=1 // loop_footer_branch
      %13 = sbr.rel target = $region3
    $region8: #{tpu_custom_call.1} parent=1 // loop_exit
      _
    %324 = vsyncpa [#allocation4], 1
    %s325 = scalar_lea.sflag [#allocation4], 1
    %326 = vsyncpa %s325, 1
    %327 = vsyncpa [#allocation6], 1
    %s328 = scalar_lea.sflag [#allocation6], 1
    %329 = vsyncpa %s328, 1

</llo_original>
